<compile_context>
chip_gen: v7x
topology: tpu7x:2x2x1
jax: 0.10.0
libtpu: 0.0.40
codegen_flags: <defaults>
</compile_context>

<pallas_src>
import collections
import functools

import jax
import jax.numpy as jnp
from jax import lax
from jax.experimental import pallas as pl
from jax.experimental.pallas import tpu as pltpu


def _round_up(x, m):
    return (x + m - 1) // m * m


_Plan = collections.namedtuple("_Plan", ["TM", "TN", "TK", "K_eff", "multi_k", "k_buffers"])


# ----------------------------------------------------------------------------
# Pallas kernels: matmul + per-channel shift (bias/BN folded) + ReLU, bf16 out.
# ----------------------------------------------------------------------------
def _pconv_kernel_single_k(xp_ref, w_ref, b_ref, y_ref):
    # Single full-K block: no accumulator scratch, no predicated init/finalize.
    acc = jnp.dot(xp_ref[...], w_ref[...], preferred_element_type=jnp.float32)
    y_ref[...] = jnp.maximum(acc + b_ref[...], 0.0).astype(y_ref.dtype)


def _pconv_kernel_multi_k(xp_ref, w_ref, b_ref, y_ref, acc_ref):
    kk = pl.program_id(2)

    @pl.when(kk == 0)
    def _():
        acc_ref[...] = jnp.zeros_like(acc_ref)

    acc_ref[...] += jnp.dot(
        xp_ref[...], w_ref[...], preferred_element_type=jnp.float32
    )

    @pl.when(kk == pl.num_programs(2) - 1)
    def _():
        y_ref[...] = jnp.maximum(acc_ref[...] + b_ref[...], 0.0).astype(y_ref.dtype)


# ----------------------------------------------------------------------------
# Generation-aware VMEM budget + tile planning.
# ----------------------------------------------------------------------------
def _vmem_budget_bytes():
    """Scoped-VMEM budget with headroom for Mosaic internal scratch."""
    try:
        cap = int(pltpu.get_tpu_info().vmem_capacity_bytes)
    except Exception:
        cap = None
    if cap is None:
        return 40 << 20  # conservative default: safe on v7x's 64 MiB per TC
    # v7x (64 MiB) -> 40 MiB; v5e/v6e (128 MiB) -> 96 MiB.
    return max(min(cap - (24 << 20), 96 << 20), 16 << 20)


def _plan_tiles(M, K, N, budget):
    limit = int(0.6 * budget)

    # N tiling: never pad N in HBM (full-dim last block is legal for any N).
    if N % 128 == 0 and N > 512:
        TN = 512 if N % 512 == 0 else (256 if N % 256 == 0 else 128)
    else:
        TN = N

    # M tiling: large blocks amortize per-grid-step overhead; keep bf16
    # sublane-packing granularity (multiple of 16, ideally 256).
    if M >= 256:
        TM = min(1024, _round_up(M, 256))
    else:
        TM = _round_up(M, 16)

    # Keep >= 2 parallel grid points when the problem allows it (v7x: 2 TCs).
    if (-(-M // TM)) * (N // TN) == 1 and M >= 512:
        TM = _round_up(-(-M // 2), 256)

    def footprint(tm, tk, tn, multi, kbuf):
        byt = kbuf * (tm * tk + tk * tn) * 2      # bf16 xp / w streams
        byt += 2 * tm * tn * 2                    # bf16 output (double buffered)
        byt += 2 * max(tn, 128) * 4               # f32 shift row
        if multi:
            byt += tm * tn * 4                    # f32 accumulator scratch
        return byt

    # 1) Prefer a single full-K block: no K padding, no accumulator machinery.
    for tm in sorted({TM, 512, 256, 128}, reverse=True):
        if tm <= TM and footprint(tm, K, TN, False, 2) <= limit:
            return _Plan(tm, TN, K, K, False, 2)

    # 2) Multi-K with TK an exact divisor of K (256-granular preferred).
    for gran in (256, 128):
        best = 0
        for tk in range(gran, min(K, 2048) + 1, gran):
            if K % tk == 0 and footprint(TM, tk, TN, True, 3) <= limit:
                best = tk
        if best:
            kbuf = 3 if (K // best) >= 4 else 2
            return _Plan(TM, TN, best, K, True, kbuf)

    # 3) Fallback: pad K (zeros folded into the im2col concat) to a TK multiple.
    tk = 512
    k_eff = _round_up(K, tk)
    tm = TM
    while tm > 128 and footprint(tm, tk, TN, True, 2) > limit:
        tm //= 2
    return _Plan(tm, TN, tk, k_eff, True, 2)


# ----------------------------------------------------------------------------
# pallas_call wrapper for the fused matmul.
# ----------------------------------------------------------------------------
def _fused_pconv_matmul(xp, w, shift, plan, vmem_limit):
    """xp: (M, K_eff) bf16 patches; w: (K_eff, N) bf16 (BN scale folded in);
    shift: (1, N) f32. Returns relu(xp @ w + shift) as (M, N) bf16."""
    M, K_eff = xp.shape
    N = w.shape[1]
    TM, TN, TK = plan.TM, plan.TN, plan.TK

    grid_m = -(-M // TM)          # ragged last M block is masked on store
    grid_n = N // TN              # TN always divides N by construction

    if not plan.multi_k:
        grid = (grid_m, grid_n)
        in_specs = [
            pl.BlockSpec((TM, K_eff), lambda i, j: (i, 0)),   # patches (bf16)
            pl.BlockSpec((K_eff, TN), lambda i, j: (0, j)),   # weights (bf16)
            pl.BlockSpec((1, TN), lambda i, j: (0, j)),       # shift   (f32)
        ]
        out_specs = pl.BlockSpec((TM, TN), lambda i, j: (i, j))
        scratch = []
        kernel = _pconv_kernel_single_k
        semantics = ("parallel", "parallel")
    else:
        grid_k = K_eff // TK
        grid = (grid_m, grid_n, grid_k)
        if plan.k_buffers >= 3:
            xp_spec = pl.BlockSpec((TM, TK), lambda i, j, kk: (i, kk),
                                   pipeline_mode=pl.Buffered(3))
            w_spec = pl.BlockSpec((TK, TN), lambda i, j, kk: (kk, j),
                                  pipeline_mode=pl.Buffered(3))
        else:
            xp_spec = pl.BlockSpec((TM, TK), lambda i, j, kk: (i, kk))
            w_spec = pl.BlockSpec((TK, TN), lambda i, j, kk: (kk, j))
        in_specs = [
            xp_spec,
            w_spec,
            pl.BlockSpec((1, TN), lambda i, j, kk: (0, j)),
        ]
        out_specs = pl.BlockSpec((TM, TN), lambda i, j, kk: (i, j))
        scratch = [pltpu.VMEM((TM, TN), jnp.float32)]
        kernel = _pconv_kernel_multi_k
        semantics = ("parallel", "parallel", "arbitrary")

    return pl.pallas_call(
        kernel,
        out_shape=jax.ShapeDtypeStruct((M, N), jnp.bfloat16),
        grid_spec=pltpu.PrefetchScalarGridSpec(
            num_scalar_prefetch=0,
            grid=grid,
            in_specs=in_specs,
            out_specs=out_specs,
            scratch_shapes=scratch,
        ),
        compiler_params=pltpu.CompilerParams(
            dimension_semantics=semantics,
            vmem_limit_bytes=int(vmem_limit),
        ),
    )(xp, w, shift)


# ----------------------------------------------------------------------------
# Plain-JAX glue: im2col (bf16, optional K padding folded into the concat),
# mask sum-pool, and the full-module wrapper.
# ----------------------------------------------------------------------------
def _im2col(x, k, stride, pad, k_total):
    """x: (B, H, W, C) -> (B*Ho*Wo, k_total), feature order (kh, kw, c)."""
    B, H, W, C = x.shape
    Ho = (H + 2 * pad - k) // stride + 1
    Wo = (W + 2 * pad - k) // stride + 1
    xp = jnp.pad(x, ((0, 0), (pad, pad), (pad, pad), (0, 0)))
    cols = []
    for di in range(k):
        for dj in range(k):
            cols.append(
                xp[
                    :,
                    di : di + stride * (Ho - 1) + 1 : stride,
                    dj : dj + stride * (Wo - 1) + 1 : stride,
                    :,
                ]
            )
    K = k * k * C
    if k_total > K:  # fallback K padding, folded into the single concat pass
        cols.append(jnp.zeros((B, Ho, Wo, k_total - K), x.dtype))
    patches = jnp.concatenate(cols, axis=-1)
    return patches.reshape(B * Ho * Wo, k_total), (B, Ho, Wo)


def inpaint_down_block_forward(
    x_nchw, mask_nchw, w_mat, conv_bias, bn_params, *, kernel_size, stride
):
    """Forward of _InpaintDownBlock.

    x_nchw, mask_nchw : (B, C_in, H, W) float32
    w_mat             : (k*k*C_in, C_out) float32 — PyTorch conv weight
                        (C_out, C_in, kh, kw).transpose(2, 3, 1, 0).reshape(-1, C_out)
    conv_bias         : (C_out,) float32
    bn_params         : (gamma, beta, running_mean, running_var, eps) or None
    Returns (x_out, updated_mask), both (B, C_out, Ho, Wo) float32.
    Note: matches the reference module exactly — conv(x*mask)+bias (no PConv
    window renormalization), eval-mode BN, ReLU, mask = (sum_conv(mask) > 0).
    """
    k = kernel_size
    pad = (k - 1) // 2  # 'same' padding (odd kernel sizes, as in the module)
    B, C_in, H, W = x_nchw.shape
    K, C_out = w_mat.shape

    # Fold conv_bias + eval-mode BatchNorm into per-channel scale/shift, then
    # fold the scale into the weights (they are re-cast anyway).
    if bn_params is not None:
        gamma, beta, rmean, rvar, eps = bn_params
        s = gamma * lax.rsqrt(rvar + eps)
        t = (conv_bias - rmean) * s + beta
    else:
        s = jnp.ones_like(conv_bias)
        t = conv_bias
    w_f32 = w_mat * s[jnp.newaxis, :]

    # NCHW -> NHWC, partial-conv masking, bf16 for the MXU.
    x = jnp.transpose(x_nchw, (0, 2, 3, 1))
    mask = jnp.transpose(mask_nchw, (0, 2, 3, 1))
    xm = (x * mask).astype(jnp.bfloat16)

    Ho = (H + 2 * pad - k) // stride + 1
    Wo = (W + 2 * pad - k) // stride + 1
    M = B * Ho * Wo

    budget = _vmem_budget_bytes()
    plan = _plan_tiles(M, K, C_out, budget)

    xp, _ = _im2col(xm, k, stride, pad, plan.K_eff)
    if plan.K_eff > K:
        w_f32 = jnp.pad(w_f32, ((0, plan.K_eff - K), (0, 0)))
    w_bf16 = w_f32.astype(jnp.bfloat16)
    t_row = t.reshape(1, -1).astype(jnp.float32)

    y = _fused_pconv_matmul(xp, w_bf16, t_row, plan, budget)  # (M, C_out) bf16
    y_nchw = jnp.transpose(
        y.reshape(B, Ho, Wo, C_out), (0, 3, 1, 2)
    ).astype(jnp.float32)
    # TODO(synk): a channels-last / bf16 output variant would skip this final
    # transpose+cast pass entirely if the surrounding network stays NHWC.

    # ---- mask update: sum_conv(mask) > 0 == (k x k sum-pool of the channel-
    #      summed mask) > 0; cheap, done outside Pallas (no k^2 expansion).
    msum_c = jnp.sum(mask, axis=-1, keepdims=True)  # (B, H, W, 1)
    msum = lax.reduce_window(
        msum_c,
        jnp.float32(0.0),
        lax.add,
        window_dimensions=(1, k, k, 1),
        window_strides=(1, stride, stride, 1),
        padding=((0, 0), (pad, pad), (pad, pad), (0, 0)),
    )  # (B, Ho, Wo, 1)
    upd_single = (msum > 0.0).astype(jnp.float32)
    # Broadcast only to preserve the module's (B, C_out, Ho, Wo) contract;
    # consumers should prefer the (B, 1, Ho, Wo) form to avoid this writeback.
    upd_mask_nchw = jnp.broadcast_to(
        jnp.transpose(upd_single, (0, 3, 1, 2)), (B, C_out, Ho, Wo)
    )

    return y_nchw, upd_mask_nchw


@functools.partial(jax.jit, static_argnames=("kernel_size", "stride"))
def _jitted_forward(x, mask, w_mat, conv_bias, gamma, beta, rmean, rvar,
                    *, kernel_size, stride):
    return inpaint_down_block_forward(
        x, mask, w_mat, conv_bias, (gamma, beta, rmean, rvar, 1e-5),
        kernel_size=kernel_size, stride=stride,
    )


# ----------------------------------------------------------------------------
# Pure-JAX reference (XLA conv) for a parity check.
# ----------------------------------------------------------------------------
def _reference_forward(x, mask, w_mat, conv_bias, gamma, beta, rmean, rvar, eps,
                       *, kernel_size, stride):
    k = kernel_size
    pad = (k - 1) // 2
    B, C_in, H, W = x.shape
    C_out = w_mat.shape[1]
    w4 = w_mat.reshape(k, k, C_in, C_out)  # HWIO, matches w_mat row ordering
    xm = x * mask
    y = lax.conv_general_dilated(
        xm, w4, window_strides=(stride, stride),
        padding=((pad, pad), (pad, pad)),
        dimension_numbers=("NCHW", "HWIO", "NCHW"))
    y = y + conv_bias[None, :, None, None]
    inv = gamma / jnp.sqrt(rvar + eps)
    y = (y - rmean[None, :, None, None]) * inv[None, :, None, None] \
        + beta[None, :, None, None]
    y = jnp.maximum(y, 0.0)
    ones_w = jnp.ones((k, k, C_in, 1), jnp.float32)
    msum = lax.conv_general_dilated(
        mask, ones_w, window_strides=(stride, stride),
        padding=((pad, pad), (pad, pad)),
        dimension_numbers=("NCHW", "HWIO", "NCHW"))
    m = jnp.broadcast_to((msum > 0.0).astype(jnp.float32), y.shape)
    return y, m


if __name__ == "__main__":
    # Small shapes consistent with the module: one down block, stride 2.
    B, C_in, H, W = 2, 4, 16, 16
    C_out, ksize, stride = 32, 3, 2

    key = jax.random.PRNGKey(0)
    kx, kw = jax.random.split(key)

    # Inputs in PyTorch NCHW layout; binary mask with a rectangular hole.
    x_nchw = jax.random.normal(kx, (B, C_in, H, W), jnp.float32)
    hole = jnp.ones((H, W), jnp.float32).at[5:11, 5:11].set(0.0)
    mask_nchw = jnp.broadcast_to(hole, (B, C_in, H, W)).astype(jnp.float32)

    # Parameters (deterministic). conv_bias is zeros, matching __init__.
    K = ksize * ksize * C_in
    w_mat = jax.random.normal(kw, (K, C_out), jnp.float32) / jnp.sqrt(jnp.float32(K))
    conv_bias = jnp.zeros((C_out,), jnp.float32)
    # BatchNorm2d at init (eval mode): gamma=1, beta=0, running stats 0/1.
    gamma = jnp.ones((C_out,), jnp.float32)
    beta = jnp.zeros((C_out,), jnp.float32)
    rmean = jnp.zeros((C_out,), jnp.float32)
    rvar = jnp.ones((C_out,), jnp.float32)

    y, m = _jitted_forward(
        x_nchw, mask_nchw, w_mat, conv_bias, gamma, beta, rmean, rvar,
        kernel_size=ksize, stride=stride,
    )
    jax.block_until_ready((y, m))

    Ho = (H + 2 * ((ksize - 1) // 2) - ksize) // stride + 1
    assert y.shape == (B, C_out, Ho, Ho), y.shape
    assert m.shape == (B, C_out, Ho, Ho), m.shape

    # Parity check against the XLA reference (generous tol for the bf16 path).
    y_ref, m_ref = _reference_forward(
        x_nchw, mask_nchw, w_mat, conv_bias, gamma, beta, rmean, rvar, 1e-5,
        kernel_size=ksize, stride=stride,
    )
    max_err = float(jnp.max(jnp.abs(y - y_ref)))
    assert max_err < 0.1, max_err
    assert bool(jnp.all(m == m_ref)), "mask mismatch"

    print("KERNEL_OK")
</pallas_src>

<mosaic_0001>
module attributes {stable_mosaic.version = 11 : i64} {
  func.func @_pconv_kernel_single_k(%arg0: i32, %arg1: i32, %arg2: memref<128x36xbf16, #tpu.memory_space<vmem>>, %arg3: memref<36x32xbf16, #tpu.memory_space<vmem>>, %arg4: memref<1x32xf32, #tpu.memory_space<vmem>>, %arg5: memref<128x32xbf16, #tpu.memory_space<vmem>>) attributes {dimension_semantics = [#tpu.dimension_semantics<parallel>, #tpu.dimension_semantics<parallel>], iteration_bounds = array<i64: 1, 1>, scalar_prefetch = 0 : i64, scratch_operands = 0 : i64, tpu.core_type = #tpu.core_type<tc>, window_params = [{transform_indices = @transform_0, window_bounds = array<i64: 128, 36>}, {transform_indices = @transform_1, window_bounds = array<i64: 36, 32>}, {transform_indices = @transform_2, window_bounds = array<i64: 1, 32>}, {transform_indices = @transform_3, window_bounds = array<i64: 128, 32>}]} {
    %c0 = arith.constant 0 : index
    %c0_0 = arith.constant 0 : index
    %0 = vector.load %arg2[%c0, %c0_0] : memref<128x36xbf16, #tpu.memory_space<vmem>>, vector<128x36xbf16>
    %c0_1 = arith.constant 0 : index
    %c0_2 = arith.constant 0 : index
    %1 = vector.load %arg3[%c0_1, %c0_2] : memref<36x32xbf16, #tpu.memory_space<vmem>>, vector<36x32xbf16>
    %cst = arith.constant dense<0.000000e+00> : vector<128x32xf32>
    %2 = tpu.matmul %0, %1, %cst {dimension_numbers = #tpu.dot_dimension_numbers<[1], [0], [0], [1], [0, 0, 1, 1], [], []>} : vector<128x36xbf16>, vector<36x32xbf16>, vector<128x32xf32> -> vector<128x32xf32>
    %c0_3 = arith.constant 0 : index
    %c0_4 = arith.constant 0 : index
    %3 = vector.load %arg4[%c0_3, %c0_4] : memref<1x32xf32, #tpu.memory_space<vmem>>, vector<1x32xf32>
    %4 = vector.broadcast %3 : vector<1x32xf32> to vector<128x32xf32>
    %5 = arith.addf %2, %4 : vector<128x32xf32>
    %cst_5 = arith.constant 0.000000e+00 : f32
    %6 = vector.broadcast %cst_5 : f32 to vector<128x32xf32>
    %7 = arith.maximumf %5, %6 : vector<128x32xf32>
    %8 = arith.truncf %7 : vector<128x32xf32> to vector<128x32xbf16>
    %c0_6 = arith.constant 0 : index
    %c0_7 = arith.constant 0 : index
    %9 = vector.load %arg5[%c0_6, %c0_7] : memref<128x32xbf16, #tpu.memory_space<vmem>>, vector<128x32xbf16>
    tpu.vector_store %arg5[%c0_6, %c0_7], %8 {strides = array<i32>} : memref<128x32xbf16, #tpu.memory_space<vmem>>, vector<128x32xbf16>,
    return
  }
  func.func @transform_0(%arg0: i32, %arg1: i32) -> (i32, i32) {
    %c0_i32 = arith.constant 0 : i32
    %c0_i32_0 = arith.constant 0 : i32
    return %arg0, %c0_i32 : i32, i32
  }
  func.func @transform_1(%arg0: i32, %arg1: i32) -> (i32, i32) {
    %c0_i32 = arith.constant 0 : i32
    %c0_i32_0 = arith.constant 0 : i32
    return %c0_i32, %arg1 : i32, i32
  }
  func.func @transform_2(%arg0: i32, %arg1: i32) -> (i32, i32) {
    %c0_i32 = arith.constant 0 : i32
    %c0_i32_0 = arith.constant 0 : i32
    return %c0_i32, %arg1 : i32, i32
  }
  func.func @transform_3(%arg0: i32, %arg1: i32) -> (i32, i32) {
    %c0_i32 = arith.constant 0 : i32
    return %arg0, %arg1 : i32, i32
  }
}

</mosaic_0001>

<llo_original>
// kernel: _jitted_forward.1
$region0: #{_jitted_forward.1}
  #allocation0 [shape = 'u32[]', space=smem, size = 0x4, offset = 0x4, fixed_abs, tag = 'smem constant byte address 0x4 - core index']
  #allocation1 [shape = 'u32[144,128]{1,0:T(1,128)}', space=vmem, size = 0x12000, scoped, tag = 'internal scratch']
  %s0 = inlined_call_operand.vmem [shape: bf16[128,36], index: 0, kind: input, shape index: {}]
  %s1 = inlined_call_operand.vmem [shape: bf16[36,32], index: 1, kind: input, shape index: {}]
  %s2 = inlined_call_operand.vmem [shape: f32[1,32], index: 2, kind: input, shape index: {}]
  %s3 = inlined_call_operand.vmem [shape: bf16[128,32], index: 3, kind: output, shape index: {}]
  %s4 = sld [smem:[#allocation0]]
  $region22: #{_jitted_forward.1} parent=0
    _
  %s6 = ssub.s32 1, %s4
  %s7 = scalar_select 0, %s6, %s4
  // Predicated region
  $region2: #{_jitted_forward.1} parent=0 // pred_check
    _
  $region3: #{_jitted_forward.1} parent=0 // pred_check_branch
    %9 = sbr.rel (0) target = $region5
  $region4: #{_jitted_forward.1} parent=0 // pred_region
    _
  $region5: #{_jitted_forward.1} parent=0 // pred_fallthru
    _
  // Predicated region
  $region6: #{_jitted_forward.1} parent=0 // pred_check
    _
  $region7: #{_jitted_forward.1} parent=0 // pred_check_branch
    %11 = sbr.rel (0) target = $region9
  $region8: #{_jitted_forward.1} parent=0 // pred_region
    _
  $region9: #{_jitted_forward.1} parent=0 // pred_fallthru
    _
  // Predicated region
  $region10: #{_jitted_forward.1} parent=0 // pred_check
    _
  $region11: #{_jitted_forward.1} parent=0 // pred_check_branch
    %13 = sbr.rel (0) target = $region13
  $region12: #{_jitted_forward.1} parent=0 // pred_region
    _
  $region13: #{_jitted_forward.1} parent=0 // pred_fallthru
    _
  %v15 = vld [vmem:[%s0] sm:$0xf]
  %v16 = vld [vmem:[%s0 + $0x4] sm:$0xf]
  %v17 = vld [vmem:[%s0 + $0x8] sm:$0xf]
  %v18 = vld [vmem:[%s0 + $0xc] sm:$0xf]
  %v19 = vld [vmem:[%s0 + $0x10] sm:$0xf]
  %v20 = vld [vmem:[%s0 + $0x14] sm:$0xf]
  %v21 = vld [vmem:[%s0 + $0x18] sm:$0xf]
  %v22 = vld [vmem:[%s0 + $0x1c] sm:$0xf]
  %v23 = vld [vmem:[%s0 + $0x20] sm:$0xf]
  %v24 = vld [vmem:[%s0 + $0x24] sm:$0xf]
  %v25 = vld [vmem:[%s0 + $0x28] sm:$0xf]
  %v26 = vld [vmem:[%s0 + $0x2c] sm:$0xf]
  %v27 = vld [vmem:[%s0 + $0x30] sm:$0xf]
  %v28 = vld [vmem:[%s0 + $0x34] sm:$0xf]
  %v29 = vld [vmem:[%s0 + $0x38] sm:$0xf]
  %v30 = vld [vmem:[%s0 + $0x3c] sm:$0xf]
  %v31 = vld [vmem:[%s1] sm:$0xf]
  %v32 = vld [vmem:[%s1 + $0x4] sm:$0xf]
  %v33 = vld [vmem:[%s1 + $0x8] sm:$0xf]
  %v34 = vld [vmem:[%s1 + $0xc] sm:$0xf]
  %v35 = vld [vmem:[%s1 + $0x10] sm:$0x3]
  %v36 = vld [vmem:[%s2] sm:$0x1]
  %v38 = vlaneseq
  %v39 = vshrl.u32 %v38, 7
  %v40 = vsub.s32 0, %v39
  %v41 = vrot.slane %v36, %v40
  %v59 = vunpack.c.l.b16 %v15
  %v60 = vunpack.c.l.b16 %v16
  %v61 = vunpack.c.l.b16 %v17
  %v62 = vunpack.c.l.b16 %v18
  %v63 = vunpack.c.l.b16 %v19
  %v64 = vunpack.c.l.b16 %v20
  %v65 = vunpack.c.l.b16 %v21
  %v66 = vunpack.c.l.b16 %v22
  %v67 = vunpack.c.l.b16 %v23
  %v68 = vunpack.c.l.b16 %v24
  %v69 = vunpack.c.l.b16 %v25
  %v70 = vunpack.c.l.b16 %v26
  %v71 = vunpack.c.l.b16 %v27
  %v72 = vunpack.c.l.b16 %v28
  %v73 = vunpack.c.l.b16 %v29
  %v74 = vunpack.c.l.b16 %v30
  %v75 = vpack.c.b16 %v60, %v59
  %v76 = vpack.c.b16 %v62, %v61
  %v77 = vpack.c.b16 %v64, %v63
  %v78 = vpack.c.b16 %v66, %v65
  %v79 = vpack.c.b16 %v68, %v67
  %v80 = vpack.c.b16 %v70, %v69
  %v81 = vpack.c.b16 %v72, %v71
  %v82 = vpack.c.b16 %v74, %v73
  %v88 = vunpack.c.l.b16 %v31
  %v89 = vunpack.c.l.b16 %v32
  %v90 = vunpack.c.l.b16 %v33
  %v91 = vunpack.c.l.b16 %v34
  %v92 = vunpack.c.l.b16 %v35
  %v93 = vpack.c.b16 %v89, %v88
  %v94 = vpack.c.b16 %v91, %v90
  %v95 = vpack.c.b16 %v92, %v92
  %vm98 = vcmask 293888
  %v100 = vsel %vm98, %v75, 0
  %v103 = vsel %vm98, %v76, 0
  %v106 = vsel %vm98, %v77, 0
  %v109 = vsel %vm98, %v78, 0
  %v112 = vsel %vm98, %v79, 0
  %v115 = vsel %vm98, %v80, 0
  %v118 = vsel %vm98, %v81, 0
  %v121 = vsel %vm98, %v82, 0
  %vm123 = vcmask 1041408
  %v125 = vsel %vm123, %v95, 0
  %127 = vmatprep.subr.bf16.mxu0 0
  %128 = vmatpush1.bf16.msra.mxu0 %v93
  %129 = vmatprep.subr.bf16.mxu0 0
  %130 = vmatpush1.bf16.msra.mxu0 %v94
  %131 = vmatprep.subr.bf16.mxu0 0
  %132 = vmatpush1.bf16.msra.mxu0 %v125
  %133 = vmatprep.subr.bf16.mxu0 0
  %134 = vmatpush1.bf16.msra.mxu0 0
  %135 = vmatprep.subr.bf16.mxu0 0
  %136 = vmatpush1.bf16.msra.mxu0 0
  %137 = vmatprep.subr.bf16.mxu0 0
  %138 = vmatpush1.bf16.msra.mxu0 0
  %139 = vmatprep.subr.bf16.mxu0 0
  %140 = vmatpush1.bf16.msra.mxu0 0
  %141 = vmatprep.subr.bf16.mxu0 0
  %142 = vmatpush1.bf16.msra.mxu0 0
  %143 = vmatprep.subr.bf16.mxu0 0
  %144 = vmatpush1.bf16.msra.mxu0 0
  %145 = vmatprep.subr.bf16.mxu0 0
  %146 = vmatpush1.bf16.msra.mxu0 0
  %147 = vmatprep.subr.bf16.mxu0 0
  %148 = vmatpush1.bf16.msra.mxu0 0
  %149 = vmatprep.subr.bf16.mxu0 0
  %150 = vmatpush1.bf16.msra.mxu0 0
  %151 = vmatprep.subr.bf16.mxu0 0
  %152 = vmatpush1.bf16.msra.mxu0 0
  %153 = vmatprep.subr.bf16.mxu0 0
  %154 = vmatpush1.bf16.msra.mxu0 0
  %155 = vmatprep.subr.bf16.mxu0 0
  %156 = vmatpush1.bf16.msra.mxu0 0
  %157 = vmatprep.subr.bf16.mxu0 0
  %158 = vmatpush1.bf16.msra.mxu0 0
  %159 = vmatprep.mubr.bf16.mxu0 0
  %160 = vmatmul.mubr.bf16.gmra.mrb[0].mxu0 %v100
  %v161 = vpop.f32.mrb[0].mxu0
  %v162 = vadd.f32 %v41, %v161
  %v163 = vpop.f32.mrb[0].mxu0
  %v164 = vpop.f32.mrb[0].mxu0
  %v165 = vadd.f32 %v41, %v164
  %v166 = vpop.f32.mrb[0].mxu0
  %167 = vmatprep.mubr.bf16.mxu0 0
  %168 = vmatmul.mubr.bf16.gmra.mrb[0].mxu0 %v103
  %v169 = vpop.f32.mrb[0].mxu0
  %v170 = vadd.f32 %v41, %v169
  %v171 = vpop.f32.mrb[0].mxu0
  %v172 = vpop.f32.mrb[0].mxu0
  %v173 = vadd.f32 %v41, %v172
  %v174 = vpop.f32.mrb[0].mxu0
  %175 = vmatprep.mubr.bf16.mxu0 0
  %176 = vmatmul.mubr.bf16.gmra.mrb[0].mxu0 %v106
  %v177 = vpop.f32.mrb[0].mxu0
  %v178 = vadd.f32 %v41, %v177
  %v179 = vpop.f32.mrb[0].mxu0
  %v180 = vpop.f32.mrb[0].mxu0
  %v181 = vadd.f32 %v41, %v180
  %v182 = vpop.f32.mrb[0].mxu0
  %183 = vmatprep.mubr.bf16.mxu0 0
  %184 = vmatmul.mubr.bf16.gmra.mrb[0].mxu0 %v109
  %v185 = vpop.f32.mrb[0].mxu0
  %v186 = vadd.f32 %v41, %v185
  %v187 = vpop.f32.mrb[0].mxu0
  %v188 = vpop.f32.mrb[0].mxu0
  %v189 = vadd.f32 %v41, %v188
  %v190 = vpop.f32.mrb[0].mxu0
  %191 = vmatprep.mubr.bf16.mxu0 0
  %192 = vmatmul.mubr.bf16.gmra.mrb[0].mxu0 %v112
  %v193 = vpop.f32.mrb[0].mxu0
  %v194 = vadd.f32 %v41, %v193
  %v195 = vpop.f32.mrb[0].mxu0
  %v196 = vpop.f32.mrb[0].mxu0
  %v197 = vadd.f32 %v41, %v196
  %v198 = vpop.f32.mrb[0].mxu0
  %199 = vmatprep.mubr.bf16.mxu0 0
  %200 = vmatmul.mubr.bf16.gmra.mrb[0].mxu0 %v115
  %v201 = vpop.f32.mrb[0].mxu0
  %v202 = vadd.f32 %v41, %v201
  %v203 = vpop.f32.mrb[0].mxu0
  %v204 = vpop.f32.mrb[0].mxu0
  %v205 = vadd.f32 %v41, %v204
  %v206 = vpop.f32.mrb[0].mxu0
  %207 = vmatprep.mubr.bf16.mxu0 0
  %208 = vmatmul.mubr.bf16.gmra.mrb[0].mxu0 %v118
  %v209 = vpop.f32.mrb[0].mxu0
  %v210 = vadd.f32 %v41, %v209
  %v211 = vpop.f32.mrb[0].mxu0
  %v212 = vpop.f32.mrb[0].mxu0
  %v213 = vadd.f32 %v41, %v212
  %v214 = vpop.f32.mrb[0].mxu0
  %215 = vmatprep.mubr.bf16.mxu0 0
  %216 = vmatmul.mubr.bf16.gmra.mrb[0].mxu0 %v121
  %v217 = vpop.f32.mrb[0].mxu0
  %v218 = vadd.f32 %v41, %v217
  %v219 = vpop.f32.mrb[0].mxu0
  %v220 = vpop.f32.mrb[0].mxu0
  %v221 = vadd.f32 %v41, %v220
  %v222 = vpop.f32.mrb[0].mxu0
  %223 = vdwg.mxu0
  %v224 = vmax.f32 %v162, 0.0
  %v225 = vmax.f32 %v165, 0.0
  %v226 = vmax.f32 %v170, 0.0
  %v227 = vmax.f32 %v173, 0.0
  %v228 = vmax.f32 %v178, 0.0
  %v229 = vmax.f32 %v181, 0.0
  %v230 = vmax.f32 %v186, 0.0
  %v231 = vmax.f32 %v189, 0.0
  %v232 = vmax.f32 %v194, 0.0
  %v233 = vmax.f32 %v197, 0.0
  %v234 = vmax.f32 %v202, 0.0
  %v235 = vmax.f32 %v205, 0.0
  %v236 = vmax.f32 %v210, 0.0
  %v237 = vmax.f32 %v213, 0.0
  %v238 = vmax.f32 %v218, 0.0
  %v239 = vmax.f32 %v221, 0.0
  %v240 = vpack.c.bf16 %v225, %v224
  %v241 = vpack.c.bf16 %v227, %v226
  %v242 = vpack.c.bf16 %v229, %v228
  %v243 = vpack.c.bf16 %v231, %v230
  %v244 = vpack.c.bf16 %v233, %v232
  %v245 = vpack.c.bf16 %v235, %v234
  %v246 = vpack.c.bf16 %v237, %v236
  %v247 = vpack.c.bf16 %v239, %v238
  %v256 = vunpack.c.l.b16 %v240
  %v257 = vunpack.c.h.b16 %v240
  %v258 = vunpack.c.l.b16 %v241
  %v259 = vunpack.c.h.b16 %v241
  %v260 = vunpack.c.l.b16 %v242
  %v261 = vunpack.c.h.b16 %v242
  %v262 = vunpack.c.l.b16 %v243
  %v263 = vunpack.c.h.b16 %v243
  %v264 = vunpack.c.l.b16 %v244
  %v265 = vunpack.c.h.b16 %v244
  %v266 = vunpack.c.l.b16 %v245
  %v267 = vunpack.c.h.b16 %v245
  %v268 = vunpack.c.l.b16 %v246
  %v269 = vunpack.c.h.b16 %v246
  %v270 = vunpack.c.l.b16 %v247
  %v271 = vunpack.c.h.b16 %v247
  %v272 = vpack.c.b16 %v256, %v256
  %v273 = vpack.c.b16 %v257, %v257
  %v274 = vpack.c.b16 %v258, %v258
  %v275 = vpack.c.b16 %v259, %v259
  %v276 = vpack.c.b16 %v260, %v260
  %v277 = vpack.c.b16 %v261, %v261
  %v278 = vpack.c.b16 %v262, %v262
  %v279 = vpack.c.b16 %v263, %v263
  %v280 = vpack.c.b16 %v264, %v264
  %v281 = vpack.c.b16 %v265, %v265
  %v282 = vpack.c.b16 %v266, %v266
  %v283 = vpack.c.b16 %v267, %v267
  %v284 = vpack.c.b16 %v268, %v268
  %v285 = vpack.c.b16 %v269, %v269
  %v286 = vpack.c.b16 %v270, %v270
  %v287 = vpack.c.b16 %v271, %v271
  %vm304 = vcmask 257024
  %305 = vst.msk [vmem:[%s3] sm:$0xf] %vm304, %v272
  %306 = vst.msk [vmem:[%s3 + $0x4] sm:$0xf] %vm304, %v273
  %307 = vst.msk [vmem:[%s3 + $0x8] sm:$0xf] %vm304, %v274
  %308 = vst.msk [vmem:[%s3 + $0xc] sm:$0xf] %vm304, %v275
  %309 = vst.msk [vmem:[%s3 + $0x10] sm:$0xf] %vm304, %v276
  %310 = vst.msk [vmem:[%s3 + $0x14] sm:$0xf] %vm304, %v277
  %311 = vst.msk [vmem:[%s3 + $0x18] sm:$0xf] %vm304, %v278
  %312 = vst.msk [vmem:[%s3 + $0x1c] sm:$0xf] %vm304, %v279
  %313 = vst.msk [vmem:[%s3 + $0x20] sm:$0xf] %vm304, %v280
  %314 = vst.msk [vmem:[%s3 + $0x24] sm:$0xf] %vm304, %v281
  %315 = vst.msk [vmem:[%s3 + $0x28] sm:$0xf] %vm304, %v282
  %316 = vst.msk [vmem:[%s3 + $0x2c] sm:$0xf] %vm304, %v283
  %317 = vst.msk [vmem:[%s3 + $0x30] sm:$0xf] %vm304, %v284
  %318 = vst.msk [vmem:[%s3 + $0x34] sm:$0xf] %vm304, %v285
  %319 = vst.msk [vmem:[%s3 + $0x38] sm:$0xf] %vm304, %v286
  %320 = vst.msk [vmem:[%s3 + $0x3c] sm:$0xf] %vm304, %v287
  // Predicated region
  $region14: #{_jitted_forward.1} parent=0 // pred_check
    _
  $region15: #{_jitted_forward.1} parent=0 // pred_check_branch
    %322 = sbr.rel (0) target = $region17
  $region16: #{_jitted_forward.1} parent=0 // pred_region
    _
  $region17: #{_jitted_forward.1} parent=0 // pred_fallthru
    _
  // Predicated region
  $region18: #{_jitted_forward.1} parent=0 // pred_check
    _
  $region19: #{_jitted_forward.1} parent=0 // pred_check_branch
    %324 = sbr.rel (0) target = $region21
  $region20: #{_jitted_forward.1} parent=0 // pred_region
    _
  $region21: #{_jitted_forward.1} parent=0 // pred_fallthru
    _

</llo_original>
